<compile_context>
chip_gen: v6e
topology: v6e:2x2x1
jax: 0.10.0
libtpu: 0.0.40
codegen_flags: <defaults>
</compile_context>

<pallas_src>
import functools

import jax
import jax.numpy as jnp
from jax.experimental import pallas as pl
from jax.experimental.pallas import tpu as pltpu


def _round_up(x, m):
    return ((x + m - 1) // m) * m


def _cdiv(a, b):
    return (a + b - 1) // b


def _patch_embed_kernel(x_ref, w_ref, b_ref, o_ref):
    # x_ref: (tm, Kpad), w_ref: (Kpad, Epad), b_ref: (1, Epad) f32, o_ref: (tm, Epad)
    acc = jnp.dot(x_ref[...], w_ref[...], preferred_element_type=jnp.float32)
    o_ref[...] = (acc + b_ref[...]).astype(o_ref.dtype)


@functools.partial(
    jax.jit,
    static_argnames=("patch_shape", "compute_dtype", "out_dtype", "tm_target"),
)
def patch_embed_3d(x, weight, bias, patch_shape, compute_dtype=None,
                   out_dtype=None, tm_target=None):
    """
    x:      (B, C, T, H, W)
    weight: (E, C, pt, ph, pw)   (PyTorch Conv3d weight layout)
    bias:   (E,)
    returns (B, N, E) with N = (T//pt)*(H//ph)*(W//pw), i.e.
            proj(x).flatten(2).transpose(1, 2)

    compute_dtype: MXU input dtype.  Default: bf16 when x is f32 (f32 accumulate,
                   f32 bias epilogue), otherwise x.dtype.
    out_dtype:     output store dtype (default x.dtype).
    """
    B, C, T, H, W = x.shape
    pt, ph, pw = patch_shape
    E = weight.shape[0]
    Tn, Hn, Wn = T // pt, H // ph, W // pw
    N = Tn * Hn * Wn
    K = C * pt * ph * pw
    M = B * N

    # --- dtypes: bf16 MXU compute by default for f32 inputs ---
    if compute_dtype is None:
        cdt = jnp.dtype(jnp.bfloat16) if x.dtype == jnp.float32 else jnp.dtype(x.dtype)
    else:
        cdt = jnp.dtype(compute_dtype)
    odt = jnp.dtype(out_dtype) if out_dtype is not None else jnp.dtype(x.dtype)

    # --- lane-dense padding of both matmul minor dims ---
    Kpad = _round_up(K, 128)
    Epad = _round_up(E, 128)

    # --- patch extraction: rows ordered (B, Tn, Hn, Wn), features (C, pt, ph, pw).
    # Cast first so any materialized intermediate is in the narrow compute dtype;
    # allow_input_fusion below lets XLA fuse this into the pallas_call input DMA.
    xp = x.astype(cdt).reshape(B, C, Tn, pt, Hn, ph, Wn, pw)
    xp = xp.transpose(0, 2, 4, 6, 1, 3, 5, 7).reshape(M, K)
    if Kpad != K:
        xp = jnp.pad(xp, ((0, 0), (0, Kpad - K)))

    w2 = weight.reshape(E, K).T.astype(cdt)            # (K, E), Conv3d feature order
    if Kpad != K or Epad != E:
        w2 = jnp.pad(w2, ((0, Kpad - K), (0, Epad - E)))
    b2 = bias.reshape(1, E).astype(jnp.float32)         # f32 epilogue
    if Epad != E:
        b2 = jnp.pad(b2, ((0, 0), (0, Epad - E)))

    # --- generation-aware VMEM budgets ---
    try:
        vmem_cap = int(pltpu.get_tpu_info().vmem_capacity_bytes)
    except Exception:
        vmem_cap = 64 << 20          # conservative (v7x-sized) fallback
    if vmem_cap >= (100 << 20):      # v5e / v6e: 128 MiB physical VMEM
        tile_budget = 56 << 20
        vmem_limit_cap = 100 << 20
        default_tm = 1024
    else:                            # v7x: 64 MiB physical VMEM
        tile_budget = 26 << 20
        vmem_limit_cap = 56 << 20
        default_tm = 512
    tm_tgt = int(tm_target) if tm_target is not None else default_tm

    in_b = cdt.itemsize
    out_b = odt.itemsize
    # weight + bias are single-buffered (pl.Buffered(1), constant index_map)
    weight_vmem = Kpad * Epad * in_b + Epad * 4
    # double-buffered activation + output tiles, plus the f32 (acc + bias) intermediate
    per_row = 2 * Kpad * in_b + 2 * Epad * out_b + Epad * 4

    avail = tile_budget - weight_vmem
    if avail < 8 * per_row:
        # TODO(synk): add an E-column grid axis (tile Epad) when the resident weight
        # alone overflows the tile budget; minimal row tile fallback for now.
        tm_cap = 8
    else:
        tm_cap = max(8, (avail // per_row) // 8 * 8)
    tm = int(min(tm_tgt, tm_cap, _round_up(M, 8)))
    # Keep >=4 grid steps when M allows so v7x's two TensorCores both get work.
    tm = max(8, min(tm, _round_up(_cdiv(M, 4), 8)))
    grid_m = _cdiv(M, tm)

    footprint = weight_vmem + tm * per_row + (2 << 20)
    vmem_limit = int(min(max(footprint, 32 << 20), vmem_limit_cap))

    cost = pl.CostEstimate(
        flops=2 * M * Kpad * Epad,
        transcendentals=0,
        bytes_accessed=int(M * Kpad * in_b + Kpad * Epad * in_b
                           + Epad * 4 + M * Epad * out_b),
    )

    out = pl.pallas_call(
        _patch_embed_kernel,
        out_shape=jax.ShapeDtypeStruct((M, Epad), odt),
        grid_spec=pltpu.PrefetchScalarGridSpec(
            num_scalar_prefetch=0,
            grid=(grid_m,),
            in_specs=[
                pl.BlockSpec((tm, Kpad), lambda i: (i, 0)),
                # constant index_map + single buffer => weight/bias resident in VMEM
                pl.BlockSpec((Kpad, Epad), lambda i: (0, 0),
                             pipeline_mode=pl.Buffered(1)),
                pl.BlockSpec((1, Epad), lambda i: (0, 0),
                             pipeline_mode=pl.Buffered(1)),
            ],
            out_specs=pl.BlockSpec((tm, Epad), lambda i: (i, 0)),
        ),
        compiler_params=pltpu.CompilerParams(
            dimension_semantics=("parallel",),
            vmem_limit_bytes=vmem_limit,
            allow_input_fusion=[True, False, False],
        ),
        cost_estimate=cost,
    )(xp, w2, b2)

    if Epad != E:
        out = out[:, :E]
    return out.reshape(B, N, E)


def _reference(x, weight, bias, patch_shape):
    # pure-JAX reference using conv_general_dilated (matches PyTorch Conv3d)
    out = jax.lax.conv_general_dilated(
        x, weight,
        window_strides=patch_shape,
        padding="VALID",
        dimension_numbers=("NCDHW", "OIDHW", "NCDHW"),
    )
    out = out + bias.reshape(1, -1, 1, 1, 1)
    B, E = out.shape[0], out.shape[1]
    return out.reshape(B, E, -1).transpose(0, 2, 1)


if __name__ == "__main__":
    # Small shapes consistent with the module
    patch_shape = (2, 4, 4)
    num_chans = 4
    embed_dim = 32
    B, T, H, W = 2, 4, 8, 8

    key = jax.random.PRNGKey(0)
    kx, kw, kb = jax.random.split(key, 3)

    x = jax.random.normal(kx, (B, num_chans, T, H, W), dtype=jnp.float32)
    fan_in = num_chans * patch_shape[0] * patch_shape[1] * patch_shape[2]
    bound = 1.0 / (fan_in ** 0.5)
    weight = jax.random.uniform(kw, (embed_dim, num_chans, *patch_shape),
                                minval=-bound, maxval=bound, dtype=jnp.float32)
    bias = jax.random.uniform(kb, (embed_dim,), minval=-bound, maxval=bound,
                              dtype=jnp.float32)

    ref = _reference(x, weight, bias, patch_shape)

    # Explicit f32 compute path: tight tolerance vs the conv reference.
    out_f32 = jax.block_until_ready(
        patch_embed_3d(x, weight, bias, patch_shape, compute_dtype=jnp.float32))
    assert out_f32.shape == ref.shape, (out_f32.shape, ref.shape)
    assert jnp.allclose(out_f32, ref, atol=1e-4, rtol=1e-4), "f32 mismatch vs reference"

    # Default path (bf16 MXU inputs, f32 accumulate + f32 bias): loosened tolerance.
    out_def = jax.block_until_ready(patch_embed_3d(x, weight, bias, patch_shape))
    assert out_def.shape == ref.shape, (out_def.shape, ref.shape)
    assert jnp.allclose(out_def, ref, atol=5e-2, rtol=5e-2), "bf16 mismatch vs reference"

    print("KERNEL_OK")
</pallas_src>

<mosaic_0001>
module attributes {stable_mosaic.version = 11 : i64} {
  func.func @_patch_embed_kernel(%arg0: i32, %arg1: memref<8x128xf32, #tpu.memory_space<vmem>>, %arg2: memref<128x128xf32, #tpu.memory_space<vmem>>, %arg3: memref<1x128xf32, #tpu.memory_space<vmem>>, %arg4: memref<8x128xf32, #tpu.memory_space<vmem>>) attributes {dimension_semantics = [#tpu.dimension_semantics<parallel>], iteration_bounds = array<i64: 2>, scalar_prefetch = 0 : i64, scratch_operands = 0 : i64, tpu.core_type = #tpu.core_type<tc>, window_params = [{transform_indices = @transform_0, window_bounds = array<i64: 8, 128>}, {pipeline_mode = #tpu.pipeline_mode<synchronous>, transform_indices = @transform_1, window_bounds = array<i64: 128, 128>}, {pipeline_mode = #tpu.pipeline_mode<synchronous>, transform_indices = @transform_2, window_bounds = array<i64: 1, 128>}, {transform_indices = @transform_3, window_bounds = array<i64: 8, 128>}]} {
    %c0 = arith.constant 0 : index
    %c0_0 = arith.constant 0 : index
    %0 = vector.load %arg1[%c0, %c0_0] : memref<8x128xf32, #tpu.memory_space<vmem>>, vector<8x128xf32>
    %c0_1 = arith.constant 0 : index
    %c0_2 = arith.constant 0 : index
    %1 = vector.load %arg2[%c0_1, %c0_2] : memref<128x128xf32, #tpu.memory_space<vmem>>, vector<128x128xf32>
    %cst = arith.constant dense<0.000000e+00> : vector<8x128xf32>
    %2 = tpu.matmul %0, %1, %cst {dimension_numbers = #tpu.dot_dimension_numbers<[1], [0], [0], [1], [0, 0, 1, 1], [], []>} : vector<8x128xf32>, vector<128x128xf32>, vector<8x128xf32> -> vector<8x128xf32>
    %c0_3 = arith.constant 0 : index
    %c0_4 = arith.constant 0 : index
    %3 = vector.load %arg3[%c0_3, %c0_4] : memref<1x128xf32, #tpu.memory_space<vmem>>, vector<1x128xf32>
    %4 = vector.broadcast %3 : vector<1x128xf32> to vector<8x128xf32>
    %5 = arith.addf %2, %4 : vector<8x128xf32>
    %c0_5 = arith.constant 0 : index
    %c0_6 = arith.constant 0 : index
    %6 = vector.load %arg4[%c0_5, %c0_6] : memref<8x128xf32, #tpu.memory_space<vmem>>, vector<8x128xf32>
    tpu.vector_store %arg4[%c0_5, %c0_6], %5 {strides = array<i32>} : memref<8x128xf32, #tpu.memory_space<vmem>>, vector<8x128xf32>,
    return
  }
  func.func @transform_0(%arg0: i32) -> (i32, i32) {
    %c0_i32 = arith.constant 0 : i32
    %c0_i32_0 = arith.constant 0 : i32
    return %arg0, %c0_i32 : i32, i32
  }
  func.func @transform_1(%arg0: i32) -> (i32, i32) {
    %c0_i32 = arith.constant 0 : i32
    %c0_i32_0 = arith.constant 0 : i32
    %c0_i32_1 = arith.constant 0 : i32
    return %c0_i32, %c0_i32_0 : i32, i32
  }
  func.func @transform_2(%arg0: i32) -> (i32, i32) {
    %c0_i32 = arith.constant 0 : i32
    %c0_i32_0 = arith.constant 0 : i32
    %c0_i32_1 = arith.constant 0 : i32
    return %c0_i32, %c0_i32_0 : i32, i32
  }
  func.func @transform_3(%arg0: i32) -> (i32, i32) {
    %c0_i32 = arith.constant 0 : i32
    %c0_i32_0 = arith.constant 0 : i32
    return %arg0, %c0_i32 : i32, i32
  }
}

</mosaic_0001>

<llo_original>
// kernel: patch_embed_3d.1
$region0: #{patch_embed_3d.1}
  #allocation0 [shape = 'u32[]', space=smem, size = 0x4, offset = 0x4, fixed_abs, tag = 'smem constant byte address 0x4 - core index']
  #allocation1 [shape = 'u32[144,128]{1,0:T(1,128)}', space=vmem, size = 0x12000, scoped, tag = 'internal scratch']
  %s0 = inlined_call_operand.vmem [shape: f32[16,128], index: 0, kind: input, shape index: {}]
  %s1 = inlined_call_operand.vmem [shape: f32[128,128], index: 1, kind: input, shape index: {}]
  %s2 = inlined_call_operand.vmem [shape: f32[1,128], index: 2, kind: input, shape index: {}]
  %s3 = inlined_call_operand.vmem [shape: f32[16,128], index: 3, kind: output, shape index: {}]
  %s4 = sld [smem:[#allocation0]]
  $region45: #{patch_embed_3d.1} parent=0
    _
  %s6 = ssub.s32 1, %s4
  %s7 = scalar_select 0, %s6, %s4
  loop: start=0, step=1, limit=4
  $region2: #{patch_embed_3d.1} parent=0 // loop_pre_header
    _
  $region3: #{patch_embed_3d.1} parent=0 // loop_header
    %s9 = sphi 0, %s13
    %p10 = scmp.ge.s32.totalorder %s9, 4
    %s19 = sphi 0, %s21
    %s22 = sphi 0, %s19
    %s23 = sphi 0, %s22
    %s39 = sphi 0, %s23
    %s43 = sphi 0, %s43
    %s45 = sphi 0, %s43
    %s46 = sphi 0, %s45
    %s60 = sphi 0, %s46
    %s64 = sphi 0, %s64
    %s66 = sphi 0, %s64
    %s67 = sphi 0, %s66
    %s81 = sphi 0, %s67
    %s87 = sphi 0, %s89
    %s90 = sphi 0, %s87
    %s91 = sphi 0, %s90
    %s107 = sphi 0, %s91
  $region4: #{patch_embed_3d.1} parent=0 // loop_header_branch
    %12 = sbr.rel (%p10) target = $region8
  $region5: #{patch_embed_3d.1} parent=0 // loop_body
    %s14 = ssub.s32 %s9, 1
    %s15 = ssub.s32 %s9, 2
    %s16 = sadd.s32 %s9, 1
    %s17 = ssub.s32 %s9, %s16
    %p18 = scmp.eq.s32.totalorder %s17, 0
    %s20 = sadd.s32 %s19, 1
    %s21 = scalar_select %p18, %s19, %s20
    %p24 = pneg %p18
    %p25 = scmp.eq.s32.totalorder %s9, 1
    %p26 = por %p24, %p25
    %p27 = scmp.ne.s32.totalorder %s19, %s22
    %p28 = scmp.eq.s32.totalorder %s9, 0
    %p29 = por %p27, %p28
    %p30 = scmp.ne.s32.totalorder %s19, %s22
    %p31 = scmp.eq.s32.totalorder %s14, 1
    %p32 = por %p30, %p31
    %p33 = scmp.ne.s32.totalorder %s22, %s23
    %p34 = scmp.eq.s32.totalorder %s14, 0
    %p35 = por %p33, %p34
    %p36 = scmp.ne.s32.totalorder %s22, %s23
    %p37 = scmp.eq.s32.totalorder %s15, 1
    %p38 = por %p36, %p37
    %p40 = scmp.ne.s32.totalorder %s23, %s39
    %p41 = scmp.eq.s32.totalorder %s15, 0
    %p42 = por %p40, %p41
    %s44 = sadd.s32 %s43, 1
    %p47 = scmp.eq.s32.totalorder %s9, 1
    %p48 = scmp.ne.s32.totalorder %s43, %s45
    %p49 = scmp.eq.s32.totalorder %s9, 0
    %p50 = por %p48, %p49
    %p51 = scmp.ne.s32.totalorder %s43, %s45
    %p52 = scmp.eq.s32.totalorder %s14, 1
    %p53 = por %p51, %p52
    %p54 = scmp.ne.s32.totalorder %s45, %s46
    %p55 = scmp.eq.s32.totalorder %s14, 0
    %p56 = por %p54, %p55
    %p57 = scmp.ne.s32.totalorder %s45, %s46
    %p58 = scmp.eq.s32.totalorder %s15, 1
    %p59 = por %p57, %p58
    %p61 = scmp.ne.s32.totalorder %s46, %s60
    %p62 = scmp.eq.s32.totalorder %s15, 0
    %p63 = por %p61, %p62
    %s65 = sadd.s32 %s64, 1
    %p68 = scmp.eq.s32.totalorder %s9, 1
    %p69 = scmp.ne.s32.totalorder %s64, %s66
    %p70 = scmp.eq.s32.totalorder %s9, 0
    %p71 = por %p69, %p70
    %p72 = scmp.ne.s32.totalorder %s64, %s66
    %p73 = scmp.eq.s32.totalorder %s14, 1
    %p74 = por %p72, %p73
    %p75 = scmp.ne.s32.totalorder %s66, %s67
    %p76 = scmp.eq.s32.totalorder %s14, 0
    %p77 = por %p75, %p76
    %p78 = scmp.ne.s32.totalorder %s66, %s67
    %p79 = scmp.eq.s32.totalorder %s15, 1
    %p80 = por %p78, %p79
    %p82 = scmp.ne.s32.totalorder %s67, %s81
    %p83 = scmp.eq.s32.totalorder %s15, 0
    %p84 = por %p82, %p83
    %s85 = ssub.s32 %s9, %s16
    %p86 = scmp.eq.s32.totalorder %s85, 0
    %s88 = sadd.s32 %s87, 1
    %s89 = scalar_select %p86, %s87, %s88
    %p92 = pneg %p86
    %p93 = scmp.eq.s32.totalorder %s9, 1
    %p94 = por %p92, %p93
    %p95 = scmp.ne.s32.totalorder %s87, %s90
    %p96 = scmp.eq.s32.totalorder %s9, 0
    %p97 = por %p95, %p96
    %p98 = scmp.ne.s32.totalorder %s87, %s90
    %p99 = scmp.eq.s32.totalorder %s14, 1
    %p100 = por %p98, %p99
    %p101 = scmp.ne.s32.totalorder %s90, %s91
    %p102 = scmp.eq.s32.totalorder %s14, 0
    %p103 = por %p101, %p102
    %p104 = scmp.ne.s32.totalorder %s90, %s91
    %p105 = scmp.eq.s32.totalorder %s15, 1
    %p106 = por %p104, %p105
    %p108 = scmp.ne.s32.totalorder %s91, %s107
    %p109 = scmp.eq.s32.totalorder %s15, 0
    %p110 = por %p108, %p109
    %p111 = scmp.le.s32.totalorder 1, %s9
    %p112 = scmp.lt.s32.totalorder %s9, 3
    %p113 = pnand %p111, %p112
    %p114 = pneg %p113
    // Predicated region
    $region9: #{patch_embed_3d.1} parent=5 // pred_check
      _
    $region10: #{patch_embed_3d.1} parent=5 // pred_check_branch
      %116 = sbr.rel (%p113) target = $region12
    $region11: #{patch_embed_3d.1} parent=5 // pred_region
      %s117 = ssub.s32 %s9, 1
      // Predicated region
      $region13: #{patch_embed_3d.1} parent=11 // pred_check
        %p118 = pneg %p56
      $region14: #{patch_embed_3d.1} parent=11 // pred_check_branch
        %120 = sbr.rel (%p118) target = $region16
      $region15: #{patch_embed_3d.1} parent=11 // pred_region
        _
      $region16: #{patch_embed_3d.1} parent=11 // pred_fallthru
        _
      // Predicated region
      $region17: #{patch_embed_3d.1} parent=11 // pred_check
        %p121 = pneg %p77
      $region18: #{patch_embed_3d.1} parent=11 // pred_check_branch
        %123 = sbr.rel (%p121) target = $region20
      $region19: #{patch_embed_3d.1} parent=11 // pred_region
        _
      $region20: #{patch_embed_3d.1} parent=11 // pred_fallthru
        _
    $region12: #{patch_embed_3d.1} parent=5 // pred_fallthru
      _
    %p124 = scmp.lt.s32.totalorder %s9, 2
    // Predicated region
    $region21: #{patch_embed_3d.1} parent=5 // pred_check
      %p125 = pneg %p124
    $region22: #{patch_embed_3d.1} parent=5 // pred_check_branch
      %127 = sbr.rel (%p125) target = $region24
    $region23: #{patch_embed_3d.1} parent=5 // pred_region
      // Predicated region
      $region25: #{patch_embed_3d.1} parent=23 // pred_check
        %p128 = pneg %p29
      $region26: #{patch_embed_3d.1} parent=23 // pred_check_branch
        %130 = sbr.rel (%p128) target = $region28
      $region27: #{patch_embed_3d.1} parent=23 // pred_region
        %p131 = scmp.lt.s32.totalorder %s9, 1
        %s132 = scalar_select %p131, %s9, 1
        %s133 = smul.addr %s132, 8
        %s134 = scalar_lea.vmem %s0, %s133
      $region28: #{patch_embed_3d.1} parent=23 // pred_fallthru
        _
    $region24: #{patch_embed_3d.1} parent=5 // pred_fallthru
      _
    %p135 = scmp.le.s32.totalorder 1, %s9
    %p136 = scmp.lt.s32.totalorder %s9, 3
    %p137 = pnand %p135, %p136
    %p138 = pneg %p137
    // Predicated region
    $region29: #{patch_embed_3d.1} parent=5 // pred_check
      _
    $region30: #{patch_embed_3d.1} parent=5 // pred_check_branch
      %140 = sbr.rel (%p137) target = $region32
    $region31: #{patch_embed_3d.1} parent=5 // pred_region
      %s141 = ssub.s32 %s9, 1
      %p142 = scmp.lt.s32.totalorder %s14, 1
      %s143 = scalar_select %p142, %s14, 1
      %s144 = smul.addr %s143, 8
      %s145 = scalar_lea.vmem %s0, %s144
      %p146 = pneg %p35
      %p147 = pneg %p32
      %p148 = pneg %p56
      %p149 = pneg %p53
      %p150 = pneg %p77
      %p151 = pneg %p74
      %p152 = pneg %p103
      %p153 = pneg %p100
      %p154 = scmp.lt.s32.totalorder %s14, 1
      %s155 = scalar_select %p154, %s14, 1
      %s156 = smul.addr %s155, 8
      %s157 = scalar_lea.vmem %s3, %s156
      %p158 = scmp.lt.s32.totalorder %s14, 1
      %s159 = scalar_select %p158, %s14, 1
      %s160 = smul.addr %s159, 8
      %s161 = scalar_lea.vmem %s0, %s160
      %p162 = scmp.lt.s32.totalorder %s14, 1
      %s163 = scalar_select %p162, %s14, 1
      %s164 = smul.addr %s163, 8
      %s165 = scalar_lea.vmem %s3, %s164
      %v166 = vld [vmem:[%s161] sm:$0xff]
      %v167 = vld [vmem:[%s1] sm:$0xff]
      %v168 = vld [vmem:[%s1 + $0x8] sm:$0xff]
      %v169 = vld [vmem:[%s1 + $0x10] sm:$0xff]
      %v170 = vld [vmem:[%s1 + $0x18] sm:$0xff]
      %v171 = vld [vmem:[%s1 + $0x20] sm:$0xff]
      %v172 = vld [vmem:[%s1 + $0x28] sm:$0xff]
      %v173 = vld [vmem:[%s1 + $0x30] sm:$0xff]
      %v174 = vld [vmem:[%s1 + $0x38] sm:$0xff]
      %v175 = vld [vmem:[%s1 + $0x40] sm:$0xff]
      %v176 = vld [vmem:[%s1 + $0x48] sm:$0xff]
      %v177 = vld [vmem:[%s1 + $0x50] sm:$0xff]
      %v178 = vld [vmem:[%s1 + $0x58] sm:$0xff]
      %v179 = vld [vmem:[%s1 + $0x60] sm:$0xff]
      %v180 = vld [vmem:[%s1 + $0x68] sm:$0xff]
      %v181 = vld [vmem:[%s1 + $0x70] sm:$0xff]
      %v182 = vld [vmem:[%s1 + $0x78] sm:$0xff]
      %v183 = vld [vmem:[%s2] sm:$0x1]
      %v185 = vlaneseq
      %v186 = vshrl.u32 %v185, 7
      %v187 = vsub.s32 0, %v186
      %v188 = vrot.slane %v183, %v187
      %190 = vmatprep.subr.mxu0 0.0
      %191 = vmatpush1.msra.mxu0 %v182
      %192 = vmatprep.subr.mxu0 0.0
      %193 = vmatpush1.msra.mxu0 %v181
      %194 = vmatprep.subr.mxu0 0.0
      %195 = vmatpush1.msra.mxu0 %v180
      %196 = vmatprep.subr.mxu0 0.0
      %197 = vmatpush1.msra.mxu0 %v179
      %198 = vmatprep.subr.mxu0 0.0
      %199 = vmatpush1.msra.mxu0 %v178
      %200 = vmatprep.subr.mxu0 0.0
      %201 = vmatpush1.msra.mxu0 %v177
      %202 = vmatprep.subr.mxu0 0.0
      %203 = vmatpush1.msra.mxu0 %v176
      %204 = vmatprep.subr.mxu0 0.0
      %205 = vmatpush1.msra.mxu0 %v175
      %206 = vmatprep.subr.mxu0 0.0
      %207 = vmatpush1.msra.mxu0 %v174
      %208 = vmatprep.subr.mxu0 0.0
      %209 = vmatpush1.msra.mxu0 %v173
      %210 = vmatprep.subr.mxu0 0.0
      %211 = vmatpush1.msra.mxu0 %v172
      %212 = vmatprep.subr.mxu0 0.0
      %213 = vmatpush1.msra.mxu0 %v171
      %214 = vmatprep.subr.mxu0 0.0
      %215 = vmatpush1.msra.mxu0 %v170
      %216 = vmatprep.subr.mxu0 0.0
      %217 = vmatpush1.msra.mxu0 %v169
      %218 = vmatprep.subr.mxu0 0.0
      %219 = vmatpush1.msra.mxu0 %v168
      %220 = vmatprep.subr.mxu0 0.0
      %221 = vmatpush1.msra.mxu0 %v167
      %222 = vmatprep.subr.mxu0 0.0
      %223 = vmatpush2.msra.mxu0 0.0
      %224 = vmatprep.subr.mxu0 0.0
      %225 = vmatpush2.msra.mxu0 0.0
      %226 = vmatprep.subr.mxu0 0.0
      %227 = vmatpush2.msra.mxu0 0.0
      %228 = vmatprep.subr.mxu0 0.0
      %229 = vmatpush2.msra.mxu0 0.0
      %230 = vmatprep.subr.mxu0 0.0
      %231 = vmatpush2.msra.mxu0 0.0
      %232 = vmatprep.subr.mxu0 0.0
      %233 = vmatpush2.msra.mxu0 0.0
      %234 = vmatprep.subr.mxu0 0.0
      %235 = vmatpush2.msra.mxu0 0.0
      %236 = vmatprep.subr.mxu0 0.0
      %237 = vmatpush2.msra.mxu0 0.0
      %238 = vmatprep.subr.mxu0 0.0
      %239 = vmatpush2.msra.mxu0 0.0
      %240 = vmatprep.subr.mxu0 0.0
      %241 = vmatpush2.msra.mxu0 0.0
      %242 = vmatprep.subr.mxu0 0.0
      %243 = vmatpush2.msra.mxu0 0.0
      %244 = vmatprep.subr.mxu0 0.0
      %245 = vmatpush2.msra.mxu0 0.0
      %246 = vmatprep.subr.mxu0 0.0
      %247 = vmatpush2.msra.mxu0 0.0
      %248 = vmatprep.subr.mxu0 0.0
      %249 = vmatpush2.msra.mxu0 0.0
      %250 = vmatprep.subr.mxu0 0.0
      %251 = vmatpush2.msra.mxu0 0.0
      %252 = vmatprep.subr.mxu0 0.0
      %253 = vmatpush2.msra.mxu0 0.0
      %254 = vmatprep.mubr.f32.mxu0 0.0
      %255 = vmatmul.mubr.f32.gmra.mxu0 %v166
      %v256 = vpop.f32.mrf.mxu0
      %v257 = vadd.f32 %v188, %v256
      %v258 = vpop.f32.mrf.mxu0
      %259 = vdwg.mxu0
      %260 = vst [vmem:[%s165] sm:$0xff] %v257
      %p261 = scmp.lt.s32.totalorder %s14, 1
      %s262 = scalar_select %p261, %s14, 1
      %s263 = smul.addr %s262, 8
      %s264 = scalar_lea.vmem %s3, %s263
      // Predicated region
      $region33: #{patch_embed_3d.1} parent=31 // pred_check
        %p265 = pneg %p100
      $region34: #{patch_embed_3d.1} parent=31 // pred_check_branch
        %267 = sbr.rel (%p265) target = $region36
      $region35: #{patch_embed_3d.1} parent=31 // pred_region
        _
      $region36: #{patch_embed_3d.1} parent=31 // pred_fallthru
        _
    $region32: #{patch_embed_3d.1} parent=5 // pred_fallthru
      _
    %p268 = scmp.le.s32.totalorder 2, %s9
    // Predicated region
    $region37: #{patch_embed_3d.1} parent=5 // pred_check
      %p269 = pneg %p268
    $region38: #{patch_embed_3d.1} parent=5 // pred_check_branch
      %271 = sbr.rel (%p269) target = $region40
    $region39: #{patch_embed_3d.1} parent=5 // pred_region
      %s272 = ssub.s32 %s9, 2
      // Predicated region
      $region41: #{patch_embed_3d.1} parent=39 // pred_check
        %p273 = pneg %p106
      $region42: #{patch_embed_3d.1} parent=39 // pred_check_branch
        %275 = sbr.rel (%p273) target = $region44
      $region43: #{patch_embed_3d.1} parent=39 // pred_region
        %p276 = scmp.lt.s32.totalorder %s15, 1
        %s277 = scalar_select %p276, %s15, 1
        %s278 = smul.addr %s277, 8
        %s279 = scalar_lea.vmem %s3, %s278
      $region44: #{patch_embed_3d.1} parent=39 // pred_fallthru
        _
    $region40: #{patch_embed_3d.1} parent=5 // pred_fallthru
      _
  $region6: #{patch_embed_3d.1} parent=0 // loop_footer
    %s13 = sadd.s32 1, %s9
  $region7: #{patch_embed_3d.1} parent=0 // loop_footer_branch
    %8 = sbr.rel target = $region3
  $region8: #{patch_embed_3d.1} parent=0 // loop_exit
    _

</llo_original>
